<compile_context>
chip_gen: v5e
topology: v5e:2x2
jax: 0.10.0
libtpu: 0.0.40
codegen_flags: <defaults>
</compile_context>

<pallas_src>
import jax
import jax.numpy as jnp
from jax.experimental import pallas as pl
from jax.experimental.pallas import tpu as pltpu


def _round_up(x, m):
    return ((x + m - 1) // m) * m


def _adj_kernel(col_ref, row_ref, adj_ref):
    # col_ref: (TM, 2) = [cx, cy] of the row-block boxes   (the "i" axis)
    # row_ref: (2, TN) = [cx; cy] of the column-block boxes (the "j" axis)
    cx_i = col_ref[:, 0:1]                      # (TM, 1)
    cy_i = col_ref[:, 1:2]                      # (TM, 1)
    cx_j = row_ref[0:1, :]                      # (1, TN)
    cy_j = row_ref[1:2, :]                      # (1, TN)
    dx = cx_j - cx_i                            # (TM, TN), dx[i, j] = cx[j] - cx[i]
    dy = cy_j - cy_i                            # (TM, TN)
    dx2 = dx * dx
    dy2 = dy * dy
    # |dy|<=0.05 <=> dy2<=0.0025 ; |dx|<=0.05 <=> dx2<=0.0025 ; dist<=0.15 <=> dx2+dy2<=0.0225
    adj_ref[...] = (dy2 <= 0.0025) | (dx2 <= 0.0025) | (dx2 + dy2 <= 0.0225)


def _hw_params():
    """Per-generation tile caps, VMEM limit and grid semantics."""
    try:
        kind = jax.devices()[0].device_kind.lower()
    except Exception:  # defensive: fall back to the conservative config
        kind = ""
    if "v7" in kind:
        # 64 MiB VMEM, 2 TensorCores: cap scoped VMEM at ~48 MiB and shard the
        # leading grid axis across both cores.
        return 512, 2048, 48 << 20, (pltpu.CORE_PARALLEL, pltpu.PARALLEL)
    # v5e / v6e: single TensorCore, 128 MiB VMEM.
    return 1024, 2048, 96 << 20, (pltpu.PARALLEL, pltpu.PARALLEL)


_ROW_PAD = 1.0e4    # pad value for "i" (row-block) centers
_COL_PAD = -1.0e4   # pad value for "j" (column-block) centers -> pad/pad never matches


def _compute_adj_padded(bboxes):
    """Padded dense bool adjacency (npr, npc); edges exist only inside [:n, :n]."""
    b = jnp.asarray(bboxes, jnp.float32).reshape(-1, 4, 2)
    n = b.shape[0]

    # Global normalization + centers, hoisted out of the kernel (plain JAX).
    width = jnp.max(b[..., 0])
    height = jnp.max(b[..., 1])
    cx = jnp.mean(b[..., 0], axis=1) / width        # (N,)
    cy = jnp.mean(b[..., 1], axis=1) / height       # (N,)

    tm_max, tn_max, vmem_limit, dim_sem = _hw_params()
    tm = min(tm_max, _round_up(n, 32))              # 32 = native bool/int8 sublane tile
    tn = min(tn_max, _round_up(n, 128))
    npr = _round_up(n, tm)                          # padded row count
    npc = _round_up(n, tn)                          # padded column count

    # Stack (cx, cy) so each grid step issues 2 small input DMAs instead of 4.
    col = jnp.stack([cx, cy], axis=1)               # (N, 2)
    col = jnp.pad(col, ((0, npr - n), (0, 0)), constant_values=_ROW_PAD)
    row = jnp.stack([cx, cy], axis=0)               # (2, N)
    row = jnp.pad(row, ((0, 0), (0, npc - n)), constant_values=_COL_PAD)

    adj_pad = pl.pallas_call(
        _adj_kernel,
        grid=(npr // tm, npc // tn),
        in_specs=[
            pl.BlockSpec((tm, 2), lambda i, j: (i, 0)),
            pl.BlockSpec((2, tn), lambda i, j: (0, j)),
        ],
        out_specs=pl.BlockSpec((tm, tn), lambda i, j: (i, j)),
        out_shape=jax.ShapeDtypeStruct((npr, npc), jnp.bool_),
        compiler_params=pltpu.CompilerParams(
            dimension_semantics=dim_sem,
            vmem_limit_bytes=vmem_limit,
        ),
    )(col, row)
    return adj_pad, n


def compute_adj(bboxes):
    """Dense (N, N) bool adjacency (debug / reference path)."""
    adj_pad, n = _compute_adj_padded(bboxes)
    return adj_pad[:n, :n]


def distant_based_graph(bboxes, output_name="edge_index"):
    """JAX/Pallas port of DistantBasedGraph.forward."""
    adj_pad, n = _compute_adj_padded(bboxes)
    # Padded region is guaranteed edge-free (distinct row/col pad values), so
    # nonzero runs on the padded array directly -- no extra N^2 slice copy.
    # TODO(synk): torch.where(adj) yields a data-dependent (2, E) edge list;
    # JAX requires static shapes, so we pad to the N*N upper bound with -1.
    i_idx, j_idx = jnp.nonzero(adj_pad, size=n * n, fill_value=-1)
    edge_index = jnp.stack([i_idx, j_idx]).astype(jnp.int32)  # (2, N*N)
    return {output_name: edge_index}


if __name__ == "__main__":
    key = jax.random.PRNGKey(0)
    n_boxes = 16
    # deterministic synthetic quad boxes in a pixel-ish coordinate range
    base = jax.random.uniform(key, (n_boxes, 1, 2), minval=0.0, maxval=1.0)
    corner_offsets = jnp.array(
        [[0.0, 0.0], [0.1, 0.0], [0.1, 0.05], [0.0, 0.05]], dtype=jnp.float32
    )[None, :, :]
    bboxes = (base + corner_offsets) * jnp.array([640.0, 480.0], dtype=jnp.float32)

    out = distant_based_graph(bboxes)
    adj = compute_adj(bboxes)
    jax.block_until_ready((out, adj))

    # pure-JAX reference check of the kernel hot path
    b = bboxes.reshape(-1, 4, 2)
    w = b[..., 0].max()
    h = b[..., 1].max()
    bn = b / jnp.array([w, h], dtype=jnp.float32)
    cxy = bn.mean(axis=1)
    dx = cxy[None, :, 0] - cxy[:, None, 0]
    dy = cxy[None, :, 1] - cxy[:, None, 1]
    dst = jnp.sqrt(dx ** 2 + dy ** 2)
    adj_ref = (jnp.abs(dy) <= 0.05) | (jnp.abs(dx) <= 0.05) | (dst <= 0.15)
    assert adj.shape == (n_boxes, n_boxes)
    assert bool(jnp.all(adj == adj_ref))

    ref_i, ref_j = jnp.nonzero(adj_ref, size=n_boxes * n_boxes, fill_value=-1)
    ref_edges = jnp.stack([ref_i, ref_j]).astype(jnp.int32)
    assert out["edge_index"].shape == (2, n_boxes * n_boxes)
    assert bool(jnp.all(out["edge_index"] == ref_edges))
    print("KERNEL_OK")
</pallas_src>

<mosaic_0001>
module attributes {stable_mosaic.version = 11 : i64} {
  func.func @_adj_kernel(%arg0: i32, %arg1: i32, %arg2: memref<32x2xf32, #tpu.memory_space<vmem>>, %arg3: memref<2x128xf32, #tpu.memory_space<vmem>>, %arg4: memref<32x128xi32, #tpu.memory_space<vmem>>) attributes {dimension_semantics = [#tpu.dimension_semantics<parallel>, #tpu.dimension_semantics<parallel>], iteration_bounds = array<i64: 1, 1>, scalar_prefetch = 0 : i64, scratch_operands = 0 : i64, tpu.core_type = #tpu.core_type<tc>, window_params = [{transform_indices = @transform_0, window_bounds = array<i64: 32, 2>}, {transform_indices = @transform_1, window_bounds = array<i64: 2, 128>}, {transform_indices = @transform_2, window_bounds = array<i64: 32, 128>}]} {
    %c0 = arith.constant 0 : index
    %c0_0 = arith.constant 0 : index
    %0 = vector.load %arg2[%c0, %c0_0] : memref<32x2xf32, #tpu.memory_space<vmem>>, vector<32x1xf32>
    %c0_1 = arith.constant 0 : index
    %c1 = arith.constant 1 : index
    %1 = vector.load %arg2[%c0_1, %c1] : memref<32x2xf32, #tpu.memory_space<vmem>>, vector<32x1xf32>
    %c0_2 = arith.constant 0 : index
    %c0_3 = arith.constant 0 : index
    %2 = vector.load %arg3[%c0_2, %c0_3] : memref<2x128xf32, #tpu.memory_space<vmem>>, vector<1x128xf32>
    %c1_4 = arith.constant 1 : index
    %c0_5 = arith.constant 0 : index
    %3 = vector.load %arg3[%c1_4, %c0_5] : memref<2x128xf32, #tpu.memory_space<vmem>>, vector<1x128xf32>
    %4 = vector.broadcast %2 : vector<1x128xf32> to vector<32x128xf32>
    %5 = vector.broadcast %0 : vector<32x1xf32> to vector<32x128xf32>
    %6 = arith.subf %4, %5 : vector<32x128xf32>
    %7 = vector.broadcast %3 : vector<1x128xf32> to vector<32x128xf32>
    %8 = vector.broadcast %1 : vector<32x1xf32> to vector<32x128xf32>
    %9 = arith.subf %7, %8 : vector<32x128xf32>
    %10 = arith.mulf %6, %6 : vector<32x128xf32>
    %11 = arith.mulf %9, %9 : vector<32x128xf32>
    %cst = arith.constant 2.500000e-03 : f32
    %12 = vector.broadcast %cst : f32 to vector<32x128xf32>
    %13 = arith.cmpf ole, %11, %12 : vector<32x128xf32>
    %cst_6 = arith.constant 2.500000e-03 : f32
    %14 = vector.broadcast %cst_6 : f32 to vector<32x128xf32>
    %15 = arith.cmpf ole, %10, %14 : vector<32x128xf32>
    %16 = arith.ori %13, %15 : vector<32x128xi1>
    %17 = arith.addf %10, %11 : vector<32x128xf32>
    %cst_7 = arith.constant 2.250000e-02 : f32
    %18 = vector.broadcast %cst_7 : f32 to vector<32x128xf32>
    %19 = arith.cmpf ole, %17, %18 : vector<32x128xf32>
    %20 = arith.ori %16, %19 : vector<32x128xi1>
    %c0_8 = arith.constant 0 : index
    %c0_9 = arith.constant 0 : index
    %21 = vector.load %arg4[%c0_8, %c0_9] : memref<32x128xi32, #tpu.memory_space<vmem>>, vector<32x128xi32>
    %22 = arith.extui %20 : vector<32x128xi1> to vector<32x128xi32>
    %cst_10 = arith.constant dense<0> : vector<32x128xi32>
    %23 = arith.cmpi ne, %21, %cst_10 : vector<32x128xi32>
    tpu.vector_store %arg4[%c0_8, %c0_9], %22 {strides = array<i32>} : memref<32x128xi32, #tpu.memory_space<vmem>>, vector<32x128xi32>,
    return
  }
  func.func @transform_0(%arg0: i32, %arg1: i32) -> (i32, i32) {
    %c0_i32 = arith.constant 0 : i32
    %c0_i32_0 = arith.constant 0 : i32
    return %arg0, %c0_i32 : i32, i32
  }
  func.func @transform_1(%arg0: i32, %arg1: i32) -> (i32, i32) {
    %c0_i32 = arith.constant 0 : i32
    %c0_i32_0 = arith.constant 0 : i32
    return %c0_i32, %arg1 : i32, i32
  }
  func.func @transform_2(%arg0: i32, %arg1: i32) -> (i32, i32) {
    %c0_i32 = arith.constant 0 : i32
    return %arg0, %arg1 : i32, i32
  }
}

</mosaic_0001>

<llo_original>
// kernel: tpu_custom_call.1
$region0: #{tpu_custom_call.1}
  #allocation0 [shape = 'u32[]', space=smem, size = 0x4, offset = 0x4, fixed_abs, tag = 'smem constant byte address 0x4 - core index']
  #allocation1 [shape = 'u32[72,128]{1,0:T(1,128)}', space=vmem, size = 0x9000, scoped, tag = 'internal scratch']
  %s0 = inlined_call_operand.vmem [shape: f32[32,2], index: 0, kind: input, shape index: {}]
  %s1 = inlined_call_operand.vmem [shape: f32[2,128], index: 1, kind: input, shape index: {}]
  %s2 = inlined_call_operand.vmem [shape: s32[32,128], index: 2, kind: output, shape index: {}]
  %s3 = sld [smem:[#allocation0]]
  $region18: #{tpu_custom_call.1} parent=0
    _
  %s5 = ssub.s32 1, %s3
  %s6 = scalar_select 0, %s5, %s3
  // Predicated region
  $region2: #{tpu_custom_call.1} parent=0 // pred_check
    _
  $region3: #{tpu_custom_call.1} parent=0 // pred_check_branch
    %8 = sbr.rel (0) target = $region5
  $region4: #{tpu_custom_call.1} parent=0 // pred_region
    _
  $region5: #{tpu_custom_call.1} parent=0 // pred_fallthru
    _
  // Predicated region
  $region6: #{tpu_custom_call.1} parent=0 // pred_check
    _
  $region7: #{tpu_custom_call.1} parent=0 // pred_check_branch
    %10 = sbr.rel (0) target = $region9
  $region8: #{tpu_custom_call.1} parent=0 // pred_region
    _
  $region9: #{tpu_custom_call.1} parent=0 // pred_fallthru
    _
  %v11 = vld [vmem:[%s0] sm:$0xff]
  %v12 = vld [vmem:[%s0 + $0x8] sm:$0xff]
  %v13 = vld [vmem:[%s0 + $0x10] sm:$0xff]
  %v14 = vld [vmem:[%s0 + $0x18] sm:$0xff]
  %v15 = vld [vmem:[%s1] sm:$0x1]
  %v16 = vld [vmem:[%s1 + $0x1] sm:$0x1]
  %v17 = vperm.slane %v15, 0
  %19 = vset.pattern.permute.xlu0 0
  %20 = vperm.xlu0 %19, %v11
  %v21 = vpop.permute.xlu0 %20
  %24 = vset.pattern.permute.xlu0 0
  %25 = vperm.xlu0 %24, %v12
  %v26 = vpop.permute.xlu0 %25
  %29 = vset.pattern.permute.xlu0 0
  %30 = vperm.xlu0 %29, %v13
  %v31 = vpop.permute.xlu0 %30
  %34 = vset.pattern.permute.xlu0 0
  %35 = vperm.xlu0 %34, %v14
  %v36 = vpop.permute.xlu0 %35
  %v38 = vsub.f32 %v17, %v21
  %v39 = vsub.f32 %v17, %v26
  %v40 = vsub.f32 %v17, %v31
  %v41 = vsub.f32 %v17, %v36
  %v42 = vperm.slane %v16, 0
  %43 = vset.pattern.permute.xlu0 1
  %44 = vperm.xlu0 %43, %v11
  %v45 = vpop.permute.xlu0 %44
  %47 = vset.pattern.permute.xlu0 1
  %48 = vperm.xlu0 %47, %v12
  %v49 = vpop.permute.xlu0 %48
  %51 = vset.pattern.permute.xlu0 1
  %52 = vperm.xlu0 %51, %v13
  %v53 = vpop.permute.xlu0 %52
  %55 = vset.pattern.permute.xlu0 1
  %56 = vperm.xlu0 %55, %v14
  %v57 = vpop.permute.xlu0 %56
  %v59 = vsub.f32 %v42, %v45
  %v60 = vsub.f32 %v42, %v49
  %v61 = vsub.f32 %v42, %v53
  %v62 = vsub.f32 %v42, %v57
  %v63 = vmul.f32 %v38, %v38
  %v64 = vmul.f32 %v39, %v39
  %v65 = vmul.f32 %v40, %v40
  %v66 = vmul.f32 %v41, %v41
  %v67 = vmul.f32 %v59, %v59
  %v68 = vmul.f32 %v60, %v60
  %v69 = vmul.f32 %v61, %v61
  %v70 = vmul.f32 %v62, %v62
  %vm71 = vcmp.le.f32.partialorder %v67, 0.0025
  %vm72 = vcmp.le.f32.partialorder %v68, 0.0025
  %vm73 = vcmp.le.f32.partialorder %v69, 0.0025
  %vm74 = vcmp.le.f32.partialorder %v70, 0.0025
  %vm75 = vcmp.le.f32.partialorder %v63, 0.0025
  %vm76 = vcmp.le.f32.partialorder %v64, 0.0025
  %vm77 = vcmp.le.f32.partialorder %v65, 0.0025
  %vm78 = vcmp.le.f32.partialorder %v66, 0.0025
  %vm79 = vmor %vm71, %vm75
  %vm80 = vmor %vm72, %vm76
  %vm81 = vmor %vm73, %vm77
  %vm82 = vmor %vm74, %vm78
  %v83 = vadd.f32 %v63, %v67
  %v84 = vadd.f32 %v64, %v68
  %v85 = vadd.f32 %v65, %v69
  %v86 = vadd.f32 %v66, %v70
  %vm87 = vcmp.le.f32.partialorder %v83, 0.0225
  %vm88 = vcmp.le.f32.partialorder %v84, 0.0225
  %vm89 = vcmp.le.f32.partialorder %v85, 0.0225
  %vm90 = vcmp.le.f32.partialorder %v86, 0.0225
  %vm91 = vmor %vm79, %vm87
  %vm92 = vmor %vm80, %vm88
  %vm93 = vmor %vm81, %vm89
  %vm94 = vmor %vm82, %vm90
  %v95 = vsel %vm91, 1, 0
  %v96 = vsel %vm92, 1, 0
  %v97 = vsel %vm93, 1, 0
  %v98 = vsel %vm94, 1, 0
  %99 = vst [vmem:[%s2] sm:$0xff] %v95
  %100 = vst [vmem:[%s2 + $0x8] sm:$0xff] %v96
  %101 = vst [vmem:[%s2 + $0x10] sm:$0xff] %v97
  %102 = vst [vmem:[%s2 + $0x18] sm:$0xff] %v98
  // Predicated region
  $region10: #{tpu_custom_call.1} parent=0 // pred_check
    _
  $region11: #{tpu_custom_call.1} parent=0 // pred_check_branch
    %104 = sbr.rel (0) target = $region13
  $region12: #{tpu_custom_call.1} parent=0 // pred_region
    _
  $region13: #{tpu_custom_call.1} parent=0 // pred_fallthru
    _
  // Predicated region
  $region14: #{tpu_custom_call.1} parent=0 // pred_check
    _
  $region15: #{tpu_custom_call.1} parent=0 // pred_check_branch
    %106 = sbr.rel (0) target = $region17
  $region16: #{tpu_custom_call.1} parent=0 // pred_region
    _
  $region17: #{tpu_custom_call.1} parent=0 // pred_fallthru
    _

</llo_original>
